<compile_context>
chip_gen: v7x
topology: tpu7x:2x2x1
jax: 0.10.0
libtpu: 0.0.40
codegen_flags: <defaults>
</compile_context>

<pallas_src>
import functools

import jax
import jax.numpy as jnp
from jax.experimental import pallas as pl
from jax.experimental.pallas import tpu as pltpu


# ----------------------------------------------------------------------------
# helpers
# ----------------------------------------------------------------------------
def _round_up(v, m):
    return (v + m - 1) // m * m


def _cdiv(a, b):
    return -(-a // b)


# ----------------------------------------------------------------------------
# Pallas kernel: fused  W2 @ leaky(W1 @ X + b1) + b2  on one (2C, TILE_HW) tile
# (W1/W2 are block-diagonal over the real/imag branches)
# ----------------------------------------------------------------------------
def _fre_cha_kernel(w1_ref, b1_ref, w2_ref, b2_ref, x_ref, o_ref, *, slope):
    # first 1x1 conv (channel matmul on the MXU), f32 accumulate
    h = jnp.dot(w1_ref[...], x_ref[...], preferred_element_type=jnp.float32)
    h = h + b1_ref[...]
    # LeakyReLU in f32 on the VPU (v5e has no bf16 VALU; compute is not the
    # bottleneck anyway)
    h = jnp.where(h >= 0.0, h, slope * h)
    # second 1x1 conv; the intermediate stays resident in VMEM
    y = jnp.dot(w2_ref[...], h.astype(w2_ref.dtype),
                preferred_element_type=jnp.float32)
    o_ref[...] = (y + b2_ref[...]).astype(o_ref.dtype)


# ----------------------------------------------------------------------------
# pure-JAX reference (also the small-problem fallback)
# ----------------------------------------------------------------------------
def fre_block_cha_ref(params, x, slope=0.1):
    n, c, hh, ww = x.shape

    def branch(xr, w1, b1, w2, b2):
        xm = xr.reshape(n, c, hh * ww)
        h1 = jnp.einsum("oc,ncp->nop", w1.reshape(c, c), xm) + b1[None, :, None]
        h1 = jnp.where(h1 >= 0.0, h1, slope * h1)
        y = jnp.einsum("oc,ncp->nop", w2.reshape(c, c), h1) + b2[None, :, None]
        return y.reshape(n, c, hh, ww)

    real = branch(jnp.real(x), params["wr1"], params["br1"],
                  params["wr2"], params["br2"])
    imag = branch(jnp.imag(x), params["wi1"], params["bi1"],
                  params["wi2"], params["bi2"])
    return jax.lax.complex(real, imag)


# ----------------------------------------------------------------------------
# module forward
# ----------------------------------------------------------------------------
def fre_block_cha(params, x, *, slope=0.1, use_bf16=True,
                  target_step_bytes=4 << 20, small_fallback=True):
    """x: complex64 (N, C, H, W) -> complex64 (N, C, H, W)."""
    n, c, hh, ww = x.shape
    hw = hh * ww
    c2 = 2 * c

    # small-problem fallback: launch + per-step overhead would dominate
    if small_fallback and n * c * hw * 4 < (1 << 20):
        return fre_block_cha_ref(params, x, slope)

    op_dtype = jnp.bfloat16 if use_bf16 else jnp.float32
    out_dtype = op_dtype            # bf16 output cuts kernel write traffic 2x
    in_b = jnp.dtype(op_dtype).itemsize
    out_b = jnp.dtype(out_dtype).itemsize

    # ---- tile sizing: fixed HBM byte budget per grid step --------------------
    hw128 = _round_up(hw, 128)
    nb = hw128 // 128                                  # 128-lane blocks of HW
    col_bytes = c2 * (in_b + out_b)                    # kernel HBM bytes/column
    tgt_blocks = max(1, target_step_bytes // (col_bytes * 128))
    n_tiles = _cdiv(nb, tgt_blocks)
    tile_blocks = _cdiv(nb, n_tiles)                   # every tile is full
    tile_hw = tile_blocks * 128
    hw_pad = tile_hw * n_tiles                         # pad < n_tiles*128 cols

    # ---- build (N, 2C, HW_pad) activation slab (no transpose) ---------------
    xr = jnp.real(x).reshape(n, c, hw)
    xi = jnp.imag(x).reshape(n, c, hw)
    x_slab = jnp.concatenate([xr, xi], axis=1).astype(op_dtype)
    if hw_pad != hw:
        # padded columns produce garbage (b2 + W2*leaky(b1)); sliced off below
        x_slab = jnp.pad(x_slab, ((0, 0), (0, 0), (0, hw_pad - hw)))

    # ---- block-diagonal weights: both branches in one matmul ----------------
    zero = jnp.zeros((c, c), jnp.float32)

    def blockdiag(a, b):
        top = jnp.concatenate([a.reshape(c, c), zero], axis=1)
        bot = jnp.concatenate([zero, b.reshape(c, c)], axis=1)
        return jnp.concatenate([top, bot], axis=0)

    w1 = blockdiag(params["wr1"], params["wi1"]).astype(op_dtype)
    w2 = blockdiag(params["wr2"], params["wi2"]).astype(op_dtype)
    b1 = jnp.concatenate([params["br1"], params["bi1"]]).reshape(c2, 1)
    b2 = jnp.concatenate([params["br2"], params["bi2"]]).reshape(c2, 1)
    b1 = b1.astype(jnp.float32)
    b2 = b2.astype(jnp.float32)

    grid = (n, n_tiles)

    # ---- VMEM budget (double-buffered tiles + f32 intermediate) -------------
    step_in = c2 * tile_hw * in_b
    step_out = c2 * tile_hw * out_b
    step_h32 = c2 * tile_hw * 4
    vmem_est = 2 * (step_in + step_out) + 3 * step_h32 \
        + 4 * c2 * c2 * in_b + 2 * c2 * 4
    vmem_limit = int(max(32 << 20, min(48 << 20, 2 * vmem_est)))

    cost = pl.CostEstimate(
        flops=4 * c2 * c2 * hw_pad * n,                       # 2 matmuls / col
        transcendentals=0,
        bytes_accessed=n * c2 * hw_pad * (in_b + out_b)
        + 2 * c2 * c2 * in_b + 2 * c2 * 4,
    )

    out = pl.pallas_call(
        functools.partial(_fre_cha_kernel, slope=slope),
        grid=grid,
        in_specs=[
            pl.BlockSpec((c2, c2), lambda b, i: (0, 0)),              # w1
            pl.BlockSpec((c2, 1), lambda b, i: (0, 0)),               # b1
            pl.BlockSpec((c2, c2), lambda b, i: (0, 0)),              # w2
            pl.BlockSpec((c2, 1), lambda b, i: (0, 0)),               # b2
            pl.BlockSpec((None, c2, tile_hw), lambda b, i: (b, 0, i)),  # x
        ],
        out_specs=pl.BlockSpec((None, c2, tile_hw), lambda b, i: (b, 0, i)),
        out_shape=jax.ShapeDtypeStruct((n, c2, hw_pad), out_dtype),
        compiler_params=pltpu.CompilerParams(
            dimension_semantics=("parallel", "parallel"),
            vmem_limit_bytes=vmem_limit),
        cost_estimate=cost,
    )(w1, b1, w2, b2, x_slab)

    # ---- reassemble complex NCHW (cast fuses with the complex build) --------
    y = out[:, :, :hw]
    real = y[:, :c].astype(jnp.float32).reshape(n, c, hh, ww)
    imag = y[:, c:].astype(jnp.float32).reshape(n, c, hh, ww)
    return jax.lax.complex(real, imag)


# ----------------------------------------------------------------------------
# deterministic parameter init (shapes follow the PyTorch __init__)
# ----------------------------------------------------------------------------
def _rnd(key, shape, scale=0.1):
    return scale * jax.random.normal(key, shape, jnp.float32)


def init_fre_cha(key, nc):
    ks = jax.random.split(key, 8)
    return {"wr1": _rnd(ks[0], (nc, nc, 1, 1)), "br1": _rnd(ks[1], (nc,)),
            "wr2": _rnd(ks[2], (nc, nc, 1, 1)), "br2": _rnd(ks[3], (nc,)),
            "wi1": _rnd(ks[4], (nc, nc, 1, 1)), "bi1": _rnd(ks[5], (nc,)),
            "wi2": _rnd(ks[6], (nc, nc, 1, 1)), "bi2": _rnd(ks[7], (nc,))}


# ----------------------------------------------------------------------------
# main
# ----------------------------------------------------------------------------
if __name__ == "__main__":
    key = jax.random.PRNGKey(0)
    kp, kr, ki, kp2, kr2, ki2 = jax.random.split(key, 6)

    # ---- test 1: module-consistent small shape, Pallas path forced ----------
    n, nc, hh, ww = 2, 4, 16, 16
    params = init_fre_cha(kp, nc)
    xr = jax.random.normal(kr, (n, nc, hh, ww), jnp.float32)
    xi = jax.random.normal(ki, (n, nc, hh, ww), jnp.float32)
    x = jax.lax.complex(xr, xi)

    fwd = jax.jit(functools.partial(fre_block_cha, params, small_fallback=False))
    y = fwd(x)
    jax.block_until_ready(y)

    assert y.shape == (n, nc, hh, ww) and y.dtype == jnp.complex64
    assert bool(jnp.all(jnp.isfinite(jnp.real(y))) and
                jnp.all(jnp.isfinite(jnp.imag(y))))
    y_ref = fre_block_cha_ref(params, x)
    err = float(jnp.max(jnp.abs(y - y_ref)))
    assert err < 5e-2, f"test1 max abs error {err}"

    # ---- test 2: odd channel count + spatial padding path -------------------
    n2, nc2, hh2, ww2 = 1, 6, 24, 20                 # HW=480 -> padded to 512
    params2 = init_fre_cha(kp2, nc2)
    xr2 = jax.random.normal(kr2, (n2, nc2, hh2, ww2), jnp.float32)
    xi2 = jax.random.normal(ki2, (n2, nc2, hh2, ww2), jnp.float32)
    x2 = jax.lax.complex(xr2, xi2)

    fwd2 = jax.jit(functools.partial(fre_block_cha, params2, small_fallback=False))
    y2 = fwd2(x2)
    jax.block_until_ready(y2)

    assert y2.shape == (n2, nc2, hh2, ww2) and y2.dtype == jnp.complex64
    y2_ref = fre_block_cha_ref(params2, x2)
    err2 = float(jnp.max(jnp.abs(y2 - y2_ref)))
    assert err2 < 5e-2, f"test2 max abs error {err2}"

    print("KERNEL_OK")
</pallas_src>

<mosaic_0001>
module attributes {stable_mosaic.version = 11 : i64} {
  func.func @_fre_cha_kernel(%arg0: i32, %arg1: i32, %arg2: memref<8x8xbf16, #tpu.memory_space<vmem>>, %arg3: memref<8x1xf32, #tpu.memory_space<vmem>>, %arg4: memref<8x8xbf16, #tpu.memory_space<vmem>>, %arg5: memref<8x1xf32, #tpu.memory_space<vmem>>, %arg6: memref<1x8x256xbf16, #tpu.memory_space<vmem>>, %arg7: memref<1x8x256xbf16, #tpu.memory_space<vmem>>) attributes {dimension_semantics = [#tpu.dimension_semantics<parallel>, #tpu.dimension_semantics<parallel>], iteration_bounds = array<i64: 2, 1>, scalar_prefetch = 0 : i64, scratch_operands = 0 : i64, tpu.core_type = #tpu.core_type<tc>, window_params = [{pipeline_mode = #tpu.pipeline_mode<synchronous>, transform_indices = @transform_0, window_bounds = array<i64: 8, 8>}, {pipeline_mode = #tpu.pipeline_mode<synchronous>, transform_indices = @transform_1, window_bounds = array<i64: 8, 1>}, {pipeline_mode = #tpu.pipeline_mode<synchronous>, transform_indices = @transform_2, window_bounds = array<i64: 8, 8>}, {pipeline_mode = #tpu.pipeline_mode<synchronous>, transform_indices = @transform_3, window_bounds = array<i64: 8, 1>}, {transform_indices = @transform_4, window_bounds = array<i64: 1, 8, 256>}, {transform_indices = @transform_5, window_bounds = array<i64: 1, 8, 256>}]} {
    %c0 = arith.constant 0 : index
    %c0_0 = arith.constant 0 : index
    %0 = vector.load %arg2[%c0, %c0_0] : memref<8x8xbf16, #tpu.memory_space<vmem>>, vector<8x8xbf16>
    %c0_1 = arith.constant 0 : index
    %c0_2 = arith.constant 0 : index
    %c0_3 = arith.constant 0 : index
    %1 = vector.load %arg6[%c0_1, %c0_2, %c0_3] : memref<1x8x256xbf16, #tpu.memory_space<vmem>>, vector<1x8x256xbf16>
    %2 = vector.shape_cast %1 : vector<1x8x256xbf16> to vector<8x256xbf16>
    %cst = arith.constant dense<0.000000e+00> : vector<8x256xf32>
    %3 = tpu.matmul %0, %2, %cst {dimension_numbers = #tpu.dot_dimension_numbers<[1], [0], [0], [1], [0, 0, 1, 1], [], []>} : vector<8x8xbf16>, vector<8x256xbf16>, vector<8x256xf32> -> vector<8x256xf32>
    %c0_4 = arith.constant 0 : index
    %c0_5 = arith.constant 0 : index
    %4 = vector.load %arg3[%c0_4, %c0_5] : memref<8x1xf32, #tpu.memory_space<vmem>>, vector<8x1xf32>
    %5 = vector.broadcast %4 : vector<8x1xf32> to vector<8x256xf32>
    %6 = arith.addf %3, %5 : vector<8x256xf32>
    %cst_6 = arith.constant 0.000000e+00 : f32
    %7 = vector.broadcast %cst_6 : f32 to vector<8x256xf32>
    %8 = arith.cmpf oge, %6, %7 : vector<8x256xf32>
    %cst_7 = arith.constant 1.000000e-01 : f32
    %9 = vector.broadcast %cst_7 : f32 to vector<8x256xf32>
    %10 = arith.mulf %9, %6 : vector<8x256xf32>
    %11 = arith.select %8, %6, %10 : vector<8x256xi1>, vector<8x256xf32>
    %c0_8 = arith.constant 0 : index
    %c0_9 = arith.constant 0 : index
    %12 = vector.load %arg4[%c0_8, %c0_9] : memref<8x8xbf16, #tpu.memory_space<vmem>>, vector<8x8xbf16>
    %13 = arith.truncf %11 : vector<8x256xf32> to vector<8x256xbf16>
    %cst_10 = arith.constant dense<0.000000e+00> : vector<8x256xf32>
    %14 = tpu.matmul %12, %13, %cst_10 {dimension_numbers = #tpu.dot_dimension_numbers<[1], [0], [0], [1], [0, 0, 1, 1], [], []>} : vector<8x8xbf16>, vector<8x256xbf16>, vector<8x256xf32> -> vector<8x256xf32>
    %c0_11 = arith.constant 0 : index
    %c0_12 = arith.constant 0 : index
    %15 = vector.load %arg5[%c0_11, %c0_12] : memref<8x1xf32, #tpu.memory_space<vmem>>, vector<8x1xf32>
    %16 = vector.broadcast %15 : vector<8x1xf32> to vector<8x256xf32>
    %17 = arith.addf %14, %16 : vector<8x256xf32>
    %18 = arith.truncf %17 : vector<8x256xf32> to vector<8x256xbf16>
    %c0_13 = arith.constant 0 : index
    %c0_14 = arith.constant 0 : index
    %c0_15 = arith.constant 0 : index
    %19 = vector.load %arg7[%c0_13, %c0_14, %c0_15] : memref<1x8x256xbf16, #tpu.memory_space<vmem>>, vector<1x8x256xbf16>
    %20 = vector.shape_cast %19 : vector<1x8x256xbf16> to vector<8x256xbf16>
    %21 = vector.shape_cast %18 : vector<8x256xbf16> to vector<1x8x256xbf16>
    tpu.vector_store %arg7[%c0_13, %c0_14, %c0_15], %21 {strides = array<i32>} : memref<1x8x256xbf16, #tpu.memory_space<vmem>>, vector<1x8x256xbf16>,
    return
  }
  func.func @transform_0(%arg0: i32, %arg1: i32) -> (i32, i32) {
    %c0_i32 = arith.constant 0 : i32
    %c0_i32_0 = arith.constant 0 : i32
    %c0_i32_1 = arith.constant 0 : i32
    return %c0_i32, %c0_i32_0 : i32, i32
  }
  func.func @transform_1(%arg0: i32, %arg1: i32) -> (i32, i32) {
    %c0_i32 = arith.constant 0 : i32
    %c0_i32_0 = arith.constant 0 : i32
    %c0_i32_1 = arith.constant 0 : i32
    return %c0_i32, %c0_i32_0 : i32, i32
  }
  func.func @transform_2(%arg0: i32, %arg1: i32) -> (i32, i32) {
    %c0_i32 = arith.constant 0 : i32
    %c0_i32_0 = arith.constant 0 : i32
    %c0_i32_1 = arith.constant 0 : i32
    return %c0_i32, %c0_i32_0 : i32, i32
  }
  func.func @transform_3(%arg0: i32, %arg1: i32) -> (i32, i32) {
    %c0_i32 = arith.constant 0 : i32
    %c0_i32_0 = arith.constant 0 : i32
    %c0_i32_1 = arith.constant 0 : i32
    return %c0_i32, %c0_i32_0 : i32, i32
  }
  func.func @transform_4(%arg0: i32, %arg1: i32) -> (i32, i32, i32) {
    %c0_i32 = arith.constant 0 : i32
    %c0_i32_0 = arith.constant 0 : i32
    return %arg0, %c0_i32, %arg1 : i32, i32, i32
  }
  func.func @transform_5(%arg0: i32, %arg1: i32) -> (i32, i32, i32) {
    %c0_i32 = arith.constant 0 : i32
    %c0_i32_0 = arith.constant 0 : i32
    return %arg0, %c0_i32, %arg1 : i32, i32, i32
  }
}

</mosaic_0001>

<llo_original>
// kernel: custom-call
$region0: #{custom-call}
  %s0 = inlined_call_operand.hbm [shape: c64[2,4,16,16], index: 0, kind: input, shape index: {}]
  %s1 = inlined_call_operand.vmem [shape: f32[2,4,16,16], index: 1, kind: output, shape index: {}]
  $region1: #{custom-call} parent=0
    #allocation0 [shape = 's32[1]{0}', space=sflag, size = 0x4, scoped, tag = 'scoped memory for custom-call']
    %2 = vsyncpa [#allocation0], 0
    %s3 = sshll.u32 %s1, 4
    %s4 = int_to_ptr.vmem [resolvable:$true] %s3
    %6 = dma.hbm_to_vmem [thread:$0]  %s0, 2048, %s4, [#allocation0]
    %7 = dma.done [#allocation0], 2048
    %8 = vsyncpa [#allocation0], 1

// kernel: custom-call.1
$region0: #{custom-call.1}
  %s0 = inlined_call_operand.hbm [shape: c64[2,4,16,16], index: 0, kind: input, shape index: {}]
  %s1 = inlined_call_operand.vmem [shape: f32[2,4,16,16], index: 1, kind: output, shape index: {}]
  %s2 = scalar_lea.hbm %s0, 2048
  $region1: #{custom-call.1} parent=0
    #allocation0 [shape = 's32[1]{0}', space=sflag, size = 0x4, scoped, tag = 'scoped memory for custom-call.1']
    %3 = vsyncpa [#allocation0], 0
    %s4 = sshll.u32 %s1, 4
    %s5 = int_to_ptr.vmem [resolvable:$true] %s4
    %7 = dma.hbm_to_vmem [thread:$0]  %s2, 2048, %s5, [#allocation0]
    %8 = dma.done [#allocation0], 2048
    %9 = vsyncpa [#allocation0], 1

// kernel: custom-call.2
$region0: #{custom-call.2}
  %s0 = inlined_call_operand.vmem [shape: f32[2,4,16,16], index: 0, kind: input, shape index: {}]
  %s1 = inlined_call_operand.vmem [shape: f32[2,4,16,16], index: 1, kind: input, shape index: {}]
  %s2 = inlined_call_operand.hbm [shape: c64[2,4,16,16], index: 2, kind: output, shape index: {}]
  %s3 = scalar_lea.hbm %s2, 2048
  $region1: #{custom-call.2} parent=0
    #allocation0 [shape = 's32[1]{0}', space=sflag, size = 0x4, scoped, tag = 'scoped memory for custom-call.2']
    %4 = vsyncpa [#allocation0], 0
    %s5 = sshll.u32 %s0, 4
    %s6 = int_to_ptr.vmem [resolvable:$true] %s5
    %8 = dma.vmem_to_hbm [thread:$0]  %s6, 2048, %s2, [#allocation0]
    %9 = dma.done [#allocation0], 2048
    %10 = vsyncpa [#allocation0], 1
  $region2: #{custom-call.2} parent=0
    #allocation1 [shape = 's32[1]{0}', space=sflag, size = 0x4, scoped, tag = 'scoped memory for custom-call.2']
    %11 = vsyncpa [#allocation1], 0
    %s12 = sshll.u32 %s1, 4
    %s13 = int_to_ptr.vmem [resolvable:$true] %s12
    %15 = dma.vmem_to_hbm [thread:$0]  %s13, 2048, %s3, [#allocation1]
    %16 = dma.done [#allocation1], 2048
    %17 = vsyncpa [#allocation1], 1

// kernel: fre_block_cha.1
$region0: #{fre_block_cha.1}
  #allocation0 [shape = 'u32[]', space=smem, size = 0x4, offset = 0x4, fixed_abs, tag = 'smem constant byte address 0x4 - core index']
  #allocation1 [shape = 'u32[144,128]{1,0:T(1,128)}', space=vmem, size = 0x12000, scoped, tag = 'internal scratch']
  %s0 = inlined_call_operand.vmem [shape: bf16[8,8], index: 0, kind: input, shape index: {}]
  %s1 = inlined_call_operand.vmem [shape: f32[8,1], index: 1, kind: input, shape index: {}]
  %s2 = inlined_call_operand.vmem [shape: bf16[8,8], index: 2, kind: input, shape index: {}]
  %s3 = inlined_call_operand.vmem [shape: f32[8,1], index: 3, kind: input, shape index: {}]
  %s4 = inlined_call_operand.vmem [shape: bf16[2,8,256], index: 4, kind: input, shape index: {}]
  %s5 = inlined_call_operand.vmem [shape: bf16[2,8,256], index: 5, kind: output, shape index: {}]
  %s6 = sld [smem:[#allocation0]]
  $region53: #{fre_block_cha.1} parent=0
    _
  %s8 = ssub.s32 1, %s6
  %s9 = scalar_select 0, %s8, %s6
  loop: start=0, step=1, limit=4
  $region2: #{fre_block_cha.1} parent=0 // loop_pre_header
    _
  $region3: #{fre_block_cha.1} parent=0 // loop_header
    %s11 = sphi 0, %s15
    %p12 = scmp.ge.s32.totalorder %s11, 4
    %s18 = sphi 0, %s30
    %s19 = sphi 0, %s26
    %s20 = sphi 0, %s18
    %s21 = sphi 0, %s19
    %s22 = sphi 0, %s20
    %s23 = sphi 0, %s21
    %s31 = sphi 0, %s31
    %s33 = sphi 0, %s31
    %s34 = sphi 0, %s33
    %s48 = sphi 0, %s34
    %s52 = sphi 0, %s52
    %s54 = sphi 0, %s52
    %s55 = sphi 0, %s54
    %s69 = sphi 0, %s55
    %s73 = sphi 0, %s73
    %s75 = sphi 0, %s73
    %s76 = sphi 0, %s75
    %s90 = sphi 0, %s76
    %s94 = sphi 0, %s94
    %s96 = sphi 0, %s94
    %s97 = sphi 0, %s96
    %s111 = sphi 0, %s97
    %s119 = sphi 0, %s121
    %s122 = sphi 0, %s119
    %s123 = sphi 0, %s122
    %s139 = sphi 0, %s123
    %s147 = sphi 0, %s149
    %s150 = sphi 0, %s147
    %s151 = sphi 0, %s150
    %s167 = sphi 0, %s151
  $region4: #{fre_block_cha.1} parent=0 // loop_header_branch
    %14 = sbr.rel (%p12) target = $region8
  $region5: #{fre_block_cha.1} parent=0 // loop_body
    %s16 = ssub.s32 %s11, 1
    %s17 = ssub.s32 %s11, 2
    %s24 = sadd.s32 1, %s19
    %p25 = scmp.ge.s32.totalorder %s24, 1
    %s26 = scalar_select %p25, 0, %s24
    %s27 = sadd.s32 1, %s18
    %s28 = scalar_select %p25, %s27, %s18
    %p29 = scmp.ge.s32.totalorder %s28, 2
    %s30 = scalar_select %p29, 0, %s28
    %s32 = sadd.s32 %s31, 1
    %p35 = scmp.eq.s32.totalorder %s11, 1
    %p36 = scmp.ne.s32.totalorder %s31, %s33
    %p37 = scmp.eq.s32.totalorder %s11, 0
    %p38 = por %p36, %p37
    %p39 = scmp.ne.s32.totalorder %s31, %s33
    %p40 = scmp.eq.s32.totalorder %s16, 1
    %p41 = por %p39, %p40
    %p42 = scmp.ne.s32.totalorder %s33, %s34
    %p43 = scmp.eq.s32.totalorder %s16, 0
    %p44 = por %p42, %p43
    %p45 = scmp.ne.s32.totalorder %s33, %s34
    %p46 = scmp.eq.s32.totalorder %s17, 1
    %p47 = por %p45, %p46
    %p49 = scmp.ne.s32.totalorder %s34, %s48
    %p50 = scmp.eq.s32.totalorder %s17, 0
    %p51 = por %p49, %p50
    %s53 = sadd.s32 %s52, 1
    %p56 = scmp.eq.s32.totalorder %s11, 1
    %p57 = scmp.ne.s32.totalorder %s52, %s54
    %p58 = scmp.eq.s32.totalorder %s11, 0
    %p59 = por %p57, %p58
    %p60 = scmp.ne.s32.totalorder %s52, %s54
    %p61 = scmp.eq.s32.totalorder %s16, 1
    %p62 = por %p60, %p61
    %p63 = scmp.ne.s32.totalorder %s54, %s55
    %p64 = scmp.eq.s32.totalorder %s16, 0
    %p65 = por %p63, %p64
    %p66 = scmp.ne.s32.totalorder %s54, %s55
    %p67 = scmp.eq.s32.totalorder %s17, 1
    %p68 = por %p66, %p67
    %p70 = scmp.ne.s32.totalorder %s55, %s69
    %p71 = scmp.eq.s32.totalorder %s17, 0
    %p72 = por %p70, %p71
    %s74 = sadd.s32 %s73, 1
    %p77 = scmp.eq.s32.totalorder %s11, 1
    %p78 = scmp.ne.s32.totalorder %s73, %s75
    %p79 = scmp.eq.s32.totalorder %s11, 0
    %p80 = por %p78, %p79
    %p81 = scmp.ne.s32.totalorder %s73, %s75
    %p82 = scmp.eq.s32.totalorder %s16, 1
    %p83 = por %p81, %p82
    %p84 = scmp.ne.s32.totalorder %s75, %s76
    %p85 = scmp.eq.s32.totalorder %s16, 0
    %p86 = por %p84, %p85
    %p87 = scmp.ne.s32.totalorder %s75, %s76
    %p88 = scmp.eq.s32.totalorder %s17, 1
    %p89 = por %p87, %p88
    %p91 = scmp.ne.s32.totalorder %s76, %s90
    %p92 = scmp.eq.s32.totalorder %s17, 0
    %p93 = por %p91, %p92
    %s95 = sadd.s32 %s94, 1
    %p98 = scmp.eq.s32.totalorder %s11, 1
    %p99 = scmp.ne.s32.totalorder %s94, %s96
    %p100 = scmp.eq.s32.totalorder %s11, 0
    %p101 = por %p99, %p100
    %p102 = scmp.ne.s32.totalorder %s94, %s96
    %p103 = scmp.eq.s32.totalorder %s16, 1
    %p104 = por %p102, %p103
    %p105 = scmp.ne.s32.totalorder %s96, %s97
    %p106 = scmp.eq.s32.totalorder %s16, 0
    %p107 = por %p105, %p106
    %p108 = scmp.ne.s32.totalorder %s96, %s97
    %p109 = scmp.eq.s32.totalorder %s17, 1
    %p110 = por %p108, %p109
    %p112 = scmp.ne.s32.totalorder %s97, %s111
    %p113 = scmp.eq.s32.totalorder %s17, 0
    %p114 = por %p112, %p113
    %s115 = ssub.s32 %s18, %s30
    %s116 = ssub.s32 %s19, %s26
    %s117 = sor.u32 %s115, %s116
    %p118 = scmp.eq.s32.totalorder %s117, 0
    %s120 = sadd.s32 %s119, 1
    %s121 = scalar_select %p118, %s119, %s120
    %p124 = pneg %p118
    %p125 = scmp.eq.s32.totalorder %s11, 1
    %p126 = por %p124, %p125
    %p127 = scmp.ne.s32.totalorder %s119, %s122
    %p128 = scmp.eq.s32.totalorder %s11, 0
    %p129 = por %p127, %p128
    %p130 = scmp.ne.s32.totalorder %s119, %s122
    %p131 = scmp.eq.s32.totalorder %s16, 1
    %p132 = por %p130, %p131
    %p133 = scmp.ne.s32.totalorder %s122, %s123
    %p134 = scmp.eq.s32.totalorder %s16, 0
    %p135 = por %p133, %p134
    %p136 = scmp.ne.s32.totalorder %s122, %s123
    %p137 = scmp.eq.s32.totalorder %s17, 1
    %p138 = por %p136, %p137
    %p140 = scmp.ne.s32.totalorder %s123, %s139
    %p141 = scmp.eq.s32.totalorder %s17, 0
    %p142 = por %p140, %p141
    %s143 = ssub.s32 %s18, %s30
    %s144 = ssub.s32 %s19, %s26
    %s145 = sor.u32 %s143, %s144
    %p146 = scmp.eq.s32.totalorder %s145, 0
    %s148 = sadd.s32 %s147, 1
    %s149 = scalar_select %p146, %s147, %s148
    %p152 = pneg %p146
    %p153 = scmp.eq.s32.totalorder %s11, 1
    %p154 = por %p152, %p153
    %p155 = scmp.ne.s32.totalorder %s147, %s150
    %p156 = scmp.eq.s32.totalorder %s11, 0
    %p157 = por %p155, %p156
    %p158 = scmp.ne.s32.totalorder %s147, %s150
    %p159 = scmp.eq.s32.totalorder %s16, 1
    %p160 = por %p158, %p159
    %p161 = scmp.ne.s32.totalorder %s150, %s151
    %p162 = scmp.eq.s32.totalorder %s16, 0
    %p163 = por %p161, %p162
    %p164 = scmp.ne.s32.totalorder %s150, %s151
    %p165 = scmp.eq.s32.totalorder %s17, 1
    %p166 = por %p164, %p165
    %p168 = scmp.ne.s32.totalorder %s151, %s167
    %p169 = scmp.eq.s32.totalorder %s17, 0
    %p170 = por %p168, %p169
    %p171 = scmp.le.s32.totalorder 1, %s11
    %p172 = scmp.lt.s32.totalorder %s11, 3
    %p173 = pnand %p171, %p172
    %p174 = pneg %p173
    // Predicated region
    $region9: #{fre_block_cha.1} parent=5 // pred_check
      _
    $region10: #{fre_block_cha.1} parent=5 // pred_check_branch
      %176 = sbr.rel (%p173) target = $region12
    $region11: #{fre_block_cha.1} parent=5 // pred_region
      %s177 = ssub.s32 %s11, 1
      // Predicated region
      $region13: #{fre_block_cha.1} parent=11 // pred_check
        %p178 = pneg %p44
      $region14: #{fre_block_cha.1} parent=11 // pred_check_branch
        %180 = sbr.rel (%p178) target = $region16
      $region15: #{fre_block_cha.1} parent=11 // pred_region
        _
      $region16: #{fre_block_cha.1} parent=11 // pred_fallthru
        _
      // Predicated region
      $region17: #{fre_block_cha.1} parent=11 // pred_check
        %p181 = pneg %p65
      $region18: #{fre_block_cha.1} parent=11 // pred_check_branch
        %183 = sbr.rel (%p181) target = $region20
      $region19: #{fre_block_cha.1} parent=11 // pred_region
        _
      $region20: #{fre_block_cha.1} parent=11 // pred_fallthru
        _
      // Predicated region
      $region21: #{fre_block_cha.1} parent=11 // pred_check
        %p184 = pneg %p86
      $region22: #{fre_block_cha.1} parent=11 // pred_check_branch
        %186 = sbr.rel (%p184) target = $region24
      $region23: #{fre_block_cha.1} parent=11 // pred_region
        _
      $region24: #{fre_block_cha.1} parent=11 // pred_fallthru
        _
      // Predicated region
      $region25: #{fre_block_cha.1} parent=11 // pred_check
        %p187 = pneg %p107
      $region26: #{fre_block_cha.1} parent=11 // pred_check_branch
        %189 = sbr.rel (%p187) target = $region28
      $region27: #{fre_block_cha.1} parent=11 // pred_region
        _
      $region28: #{fre_block_cha.1} parent=11 // pred_fallthru
        _
    $region12: #{fre_block_cha.1} parent=5 // pred_fallthru
      _
    %p190 = scmp.lt.s32.totalorder %s11, 2
    // Predicated region
    $region29: #{fre_block_cha.1} parent=5 // pred_check
      %p191 = pneg %p190
    $region30: #{fre_block_cha.1} parent=5 // pred_check_branch
      %193 = sbr.rel (%p191) target = $region32
    $region31: #{fre_block_cha.1} parent=5 // pred_region
      // Predicated region
      $region33: #{fre_block_cha.1} parent=31 // pred_check
        %p194 = pneg %p129
      $region34: #{fre_block_cha.1} parent=31 // pred_check_branch
        %196 = sbr.rel (%p194) target = $region36
      $region35: #{fre_block_cha.1} parent=31 // pred_region
        %s197 = smul.u32 2, %s19
        %p198 = scmp.lt.s32.totalorder %s18, 1
        %s199 = scalar_select %p198, %s18, 1
        %p200 = scmp.lt.s32.totalorder %s197, 1
        %s201 = scalar_select %p200, %s197, 1
        %s202 = smul.addr %s199, 2
        %s203 = sadd.s32 %s201, %s202
        %s204 = smul.addr %s203, 4
        %s205 = scalar_lea.vmem %s4, %s204
        %s206 = smul.u32 2, %s19
      $region36: #{fre_block_cha.1} parent=31 // pred_fallthru
        _
    $region32: #{fre_block_cha.1} parent=5 // pred_fallthru
      _
    %p207 = scmp.le.s32.totalorder 1, %s11
    %p208 = scmp.lt.s32.totalorder %s11, 3
    %p209 = pnand %p207, %p208
    %p210 = pneg %p209
    // Predicated region
    $region37: #{fre_block_cha.1} parent=5 // pred_check
      _
    $region38: #{fre_block_cha.1} parent=5 // pred_check_branch
      %212 = sbr.rel (%p209) target = $region40
    $region39: #{fre_block_cha.1} parent=5 // pred_region
      %s213 = ssub.s32 %s11, 1
      %p214 = pneg %p44
      %p215 = pneg %p41
      %p216 = pneg %p65
      %p217 = pneg %p62
      %p218 = pneg %p86
      %p219 = pneg %p83
      %p220 = pneg %p107
      %p221 = pneg %p104
      %s222 = smul.u32 2, %s21
      %p223 = scmp.lt.s32.totalorder %s20, 1
      %s224 = scalar_select %p223, %s20, 1
      %p225 = scmp.lt.s32.totalorder %s222, 1
      %s226 = scalar_select %p225, %s222, 1
      %s227 = smul.addr %s224, 2
      %s228 = sadd.s32 %s226, %s227
      %s229 = smul.addr %s228, 4
      %s230 = scalar_lea.vmem %s4, %s229
      %p231 = pneg %p135
      %p232 = pneg %p132
      %p233 = pneg %p163
      %p234 = pneg %p160
      %s235 = smul.u32 2, %s21
      %p236 = scmp.lt.s32.totalorder %s20, 1
      %s237 = scalar_select %p236, %s20, 1
      %p238 = scmp.lt.s32.totalorder %s235, 1
      %s239 = scalar_select %p238, %s235, 1
      %s240 = smul.addr %s237, 2
      %s241 = sadd.s32 %s239, %s240
      %s242 = smul.addr %s241, 4
      %s243 = scalar_lea.vmem %s5, %s242
      %s244 = smul.u32 2, %s21
      %p245 = scmp.lt.s32.totalorder %s20, 1
      %s246 = scalar_select %p245, %s20, 1
      %p247 = scmp.lt.s32.totalorder %s244, 1
      %s248 = scalar_select %p247, %s244, 1
      %s249 = smul.addr %s246, 2
      %s250 = sadd.s32 %s248, %s249
      %s251 = smul.addr %s250, 4
      %s252 = scalar_lea.vmem %s4, %s251
      %s253 = smul.u32 2, %s21
      %s254 = smul.u32 2, %s21
      %p255 = scmp.lt.s32.totalorder %s20, 1
      %s256 = scalar_select %p255, %s20, 1
      %p257 = scmp.lt.s32.totalorder %s254, 1
      %s258 = scalar_select %p257, %s254, 1
      %s259 = smul.addr %s256, 2
      %s260 = sadd.s32 %s258, %s259
      %s261 = smul.addr %s260, 4
      %s262 = scalar_lea.vmem %s5, %s261
      %s263 = smul.u32 2, %s21
      %v265 = vld [vmem:[%s0] sm:$0xf]
      %v266 = vld [vmem:[%s252] sm:$0xff]
      %v267 = vld [vmem:[%s1] sm:$0xff]
      %269 = vset.pattern.permute.xlu0 0
      %270 = vperm.xlu0 %269, %v267
      %v271 = vpop.permute.xlu0 %270
      %v274 = vunpack.c.l.b16 %v266
      %v275 = vunpack.c.h.b16 %v266
      %v276 = vpack.c.b16 %v274, %v274
      %v277 = vpack.c.b16 %v275, %v275
      %vm278 = vcmask 64512
      %v280 = vsel %vm278, %v265, 0
      %vm282 = vcmask 1043456
      %v284 = vsel %vm282, %v276, 0
      %v287 = vsel %vm282, %v277, 0
      %289 = vmatprep.subr.bf16.mxu0 %v287
      %290 = vmatpush1.bf16.msra.mxu0 %v284
      %291 = vmatprep.subr.bf16.mxu0 0
      %292 = vmatpush1.bf16.msra.mxu0 0
      %293 = vmatprep.subr.bf16.mxu0 0
      %294 = vmatpush1.bf16.msra.mxu0 0
      %295 = vmatprep.subr.bf16.mxu0 0
      %296 = vmatpush1.bf16.msra.mxu0 0
      %297 = vmatprep.subr.bf16.mxu0 0
      %298 = vmatpush1.bf16.msra.mxu0 0
      %299 = vmatprep.subr.bf16.mxu0 0
      %300 = vmatpush1.bf16.msra.mxu0 0
      %301 = vmatprep.subr.bf16.mxu0 0
      %302 = vmatpush1.bf16.msra.mxu0 0
      %303 = vmatprep.subr.bf16.mxu0 0
      %304 = vmatpush1.bf16.msra.mxu0 0
      %305 = vmatprep.subr.bf16.mxu0 0
      %306 = vmatpush1.bf16.msra.mxu0 0
      %307 = vmatprep.subr.bf16.mxu0 0
      %308 = vmatpush1.bf16.msra.mxu0 0
      %309 = vmatprep.subr.bf16.mxu0 0
      %310 = vmatpush1.bf16.msra.mxu0 0
      %311 = vmatprep.subr.bf16.mxu0 0
      %312 = vmatpush1.bf16.msra.mxu0 0
      %313 = vmatprep.subr.bf16.mxu0 0
      %314 = vmatpush1.bf16.msra.mxu0 0
      %315 = vmatprep.subr.bf16.mxu0 0
      %316 = vmatpush1.bf16.msra.mxu0 0
      %317 = vmatprep.subr.bf16.mxu0 0
      %318 = vmatpush1.bf16.msra.mxu0 0
      %319 = vmatprep.subr.bf16.mxu0 0
      %320 = vmatpush1.bf16.msra.mxu0 0
      %321 = vmatprep.mubr.bf16.mxu0 0
      %322 = vmatmul.mubr.bf16.gmra.mrb[0].mxu0 %v280
      %v323 = vpop.f32.mrb[0].mxu0
      %v324 = vadd.f32 %v271, %v323
      %v325 = vpop.f32.mrb[0].mxu0
      %v326 = vadd.f32 %v271, %v325
      %v327 = vpop.f32.mrb[0].mxu0
      %v328 = vpop.f32.mrb[0].mxu0
      %329 = vdwg.mxu0
      %vm330 = vcmp.ge.f32.partialorder %v324, 0.0
      %vm331 = vcmp.ge.f32.partialorder %v326, 0.0
      %v332 = vmul.f32 %v324, 0.1
      %v333 = vmul.f32 %v326, 0.1
      %v334 = vsel %vm330, %v324, %v332
      %v335 = vsel %vm331, %v326, %v333
      %v336 = vld [vmem:[%s2] sm:$0xf]
      %v337 = vpack.c.bf16 %v334, %v334
      %v338 = vpack.c.bf16 %v335, %v335
      %v339 = vld [vmem:[%s3] sm:$0xff]
      %341 = vset.pattern.permute.xlu0 0
      %342 = vperm.xlu0 %341, %v339
      %v343 = vpop.permute.xlu0 %342
      %v346 = vsel %vm278, %v336, 0
      %v349 = vsel %vm282, %v337, 0
      %v352 = vsel %vm282, %v338, 0
      %354 = vmatprep.subr.bf16.mxu0 %v352
      %355 = vmatpush1.bf16.msra.mxu0 %v349
      %356 = vmatprep.subr.bf16.mxu0 0
      %357 = vmatpush1.bf16.msra.mxu0 0
      %358 = vmatprep.subr.bf16.mxu0 0
      %359 = vmatpush1.bf16.msra.mxu0 0
      %360 = vmatprep.subr.bf16.mxu0 0
      %361 = vmatpush1.bf16.msra.mxu0 0
      %362 = vmatprep.subr.bf16.mxu0 0
      %363 = vmatpush1.bf16.msra.mxu0 0
      %364 = vmatprep.subr.bf16.mxu0 0
      %365 = vmatpush1.bf16.msra.mxu0 0
      %366 = vmatprep.subr.bf16.mxu0 0
      %367 = vmatpush1.bf16.msra.mxu0 0
      %368 = vmatprep.subr.bf16.mxu0 0
      %369 = vmatpush1.bf16.msra.mxu0 0
      %370 = vmatprep.subr.bf16.mxu0 0
      %371 = vmatpush1.bf16.msra.mxu0 0
      %372 = vmatprep.subr.bf16.mxu0 0
      %373 = vmatpush1.bf16.msra.mxu0 0
      %374 = vmatprep.subr.bf16.mxu0 0
      %375 = vmatpush1.bf16.msra.mxu0 0
      %376 = vmatprep.subr.bf16.mxu0 0
      %377 = vmatpush1.bf16.msra.mxu0 0
      %378 = vmatprep.subr.bf16.mxu0 0
      %379 = vmatpush1.bf16.msra.mxu0 0
      %380 = vmatprep.subr.bf16.mxu0 0
      %381 = vmatpush1.bf16.msra.mxu0 0
      %382 = vmatprep.subr.bf16.mxu0 0
      %383 = vmatpush1.bf16.msra.mxu0 0
      %384 = vmatprep.subr.bf16.mxu0 0
      %385 = vmatpush1.bf16.msra.mxu0 0
      %386 = vmatprep.mubr.bf16.mxu0 0
      %387 = vmatmul.mubr.bf16.gmra.mrb[0].mxu0 %v346
      %v388 = vpop.f32.mrb[0].mxu0
      %v389 = vadd.f32 %v343, %v388
      %v390 = vpop.f32.mrb[0].mxu0
      %v391 = vadd.f32 %v343, %v390
      %v392 = vpop.f32.mrb[0].mxu0
      %v393 = vpop.f32.mrb[0].mxu0
      %394 = vdwg.mxu0
      %v395 = vpack.c.bf16 %v389, %v389
      %v396 = vpack.c.bf16 %v391, %v391
      %v399 = vunpack.c.l.b16 %v395
      %v400 = vunpack.c.l.b16 %v396
      %v401 = vpack.c.b16 %v400, %v399
      %403 = vst [vmem:[%s262] sm:$0xff] %v401
      %s404 = smul.u32 2, %s21
      %p405 = scmp.lt.s32.totalorder %s20, 1
      %s406 = scalar_select %p405, %s20, 1
      %p407 = scmp.lt.s32.totalorder %s404, 1
      %s408 = scalar_select %p407, %s404, 1
      %s409 = smul.addr %s406, 2
      %s410 = sadd.s32 %s408, %s409
      %s411 = smul.addr %s410, 4
      %s412 = scalar_lea.vmem %s5, %s411
      // Predicated region
      $region41: #{fre_block_cha.1} parent=39 // pred_check
        %p413 = pneg %p160
      $region42: #{fre_block_cha.1} parent=39 // pred_check_branch
        %415 = sbr.rel (%p413) target = $region44
      $region43: #{fre_block_cha.1} parent=39 // pred_region
        %s416 = smul.u32 2, %s21
      $region44: #{fre_block_cha.1} parent=39 // pred_fallthru
        _
    $region40: #{fre_block_cha.1} parent=5 // pred_fallthru
      _
    %p417 = scmp.le.s32.totalorder 2, %s11
    // Predicated region
    $region45: #{fre_block_cha.1} parent=5 // pred_check
      %p418 = pneg %p417
    $region46: #{fre_block_cha.1} parent=5 // pred_check_branch
      %420 = sbr.rel (%p418) target = $region48
    $region47: #{fre_block_cha.1} parent=5 // pred_region
      %s421 = ssub.s32 %s11, 2
      // Predicated region
      $region49: #{fre_block_cha.1} parent=47 // pred_check
        %p422 = pneg %p166
      $region50: #{fre_block_cha.1} parent=47 // pred_check_branch
        %424 = sbr.rel (%p422) target = $region52
      $region51: #{fre_block_cha.1} parent=47 // pred_region
        %s425 = smul.u32 2, %s23
        %p426 = scmp.lt.s32.totalorder %s22, 1
        %s427 = scalar_select %p426, %s22, 1
        %p428 = scmp.lt.s32.totalorder %s425, 1
        %s429 = scalar_select %p428, %s425, 1
        %s430 = smul.addr %s427, 2
        %s431 = sadd.s32 %s429, %s430
        %s432 = smul.addr %s431, 4
        %s433 = scalar_lea.vmem %s5, %s432
      $region52: #{fre_block_cha.1} parent=47 // pred_fallthru
        _
    $region48: #{fre_block_cha.1} parent=5 // pred_fallthru
      _
  $region6: #{fre_block_cha.1} parent=0 // loop_footer
    %s15 = sadd.s32 1, %s11
  $region7: #{fre_block_cha.1} parent=0 // loop_footer_branch
    %10 = sbr.rel target = $region3
  $region8: #{fre_block_cha.1} parent=0 // loop_exit
    _

</llo_original>
